<compile_context>
chip_gen: v7x
topology: tpu7x:2x2x1
jax: 0.10.0
libtpu: 0.0.40
codegen_flags: <defaults>
</compile_context>

<pallas_src>
import functools

import jax
import jax.numpy as jnp
from jax.experimental import pallas as pl
from jax.experimental.pallas import tpu as pltpu


def _round_up(x, m):
    return ((x + m - 1) // m) * m


def _ffn_kernel(x_ref, w1_ref, b1_ref, w2_ref, b2_ref, o_ref,
                acc_ref, rsum_ref, rsq_ref, csum_ref, *, d_ff, eps):
    k = pl.program_id(1)
    nk = pl.num_programs(1)

    @pl.when(k == 0)
    def _init():
        acc_ref[...] = jnp.zeros_like(acc_ref)
        rsum_ref[...] = jnp.zeros_like(rsum_ref)
        rsq_ref[...] = jnp.zeros_like(rsq_ref)
        csum_ref[...] = jnp.zeros_like(csum_ref)

    # ---- linear1 block: (TM, d_model) @ (d_model, TF) -> f32 accum on MXU ----
    h = jnp.dot(x_ref[...], w1_ref[...], preferred_element_type=jnp.float32)
    h = h + b1_ref[...].astype(jnp.float32)

    # ---- GELU (tanh approx) in f32 ----
    h = jax.nn.gelu(h, approximate=True)

    # ---- running row statistics for the LayerNorm over d_ff (one pass) ----
    rsum_ref[...] += jnp.sum(h, axis=-1, keepdims=True)
    rsq_ref[...] += jnp.sum(h * h, axis=-1, keepdims=True)

    # ---- running column sum of W2 (for the mean-subtraction term) ----
    w2 = w2_ref[...]
    csum_ref[...] += jnp.sum(w2.astype(jnp.float32), axis=0, keepdims=True)

    # ---- linear2 as K-reduction over d_ff blocks (MXU, f32 accumulator) ----
    acc_ref[...] += jnp.dot(h.astype(w2.dtype), w2,
                            preferred_element_type=jnp.float32)

    @pl.when(k == nk - 1)
    def _finalize():
        inv_d = jnp.float32(1.0 / d_ff)
        mean = rsum_ref[...] * inv_d                       # (TM, 1)
        var = rsq_ref[...] * inv_d - mean * mean
        var = jnp.maximum(var, 0.0)
        inv_std = jax.lax.rsqrt(var + jnp.float32(eps))    # EUP
        # norm(h) @ W2 == inv_std * (h @ W2 - mean * colsum(W2))
        y = inv_std * (acc_ref[...] - mean * csum_ref[...])
        y = y + b2_ref[...].astype(jnp.float32)
        o_ref[...] = y.astype(o_ref.dtype)


@functools.partial(jax.jit,
                   static_argnames=("block_rows", "block_ff",
                                    "vmem_limit_bytes"))
def feed_forward(x, w1, b1, w2, b2, *, block_rows=256, block_ff=512,
                 vmem_limit_bytes=48 * 1024 * 1024):
    """x: (N, d_model); w1: (d_model, d_ff)=linear1.weight.T; w2: (d_ff, d_model)."""
    n, d_model = x.shape
    d_ff = w1.shape[1]
    assert w1.shape == (d_model, d_ff)
    assert w2.shape == (d_ff, d_model)
    b1 = b1.reshape(1, d_ff)
    b2 = b2.reshape(1, d_model)

    # Row tile: multiple of 8 sublanes, clamped to the (padded) token count.
    tm = min(block_rows, _round_up(n, 8))
    tm = max(8, _round_up(tm, 8))
    n_pad = _round_up(n, tm)
    if n_pad != n:
        x = jnp.pad(x, ((0, n_pad - n), (0, 0)))

    # d_ff tile: multiple of 128 lanes that divides d_ff, else the full d_ff.
    tf = min(block_ff, d_ff)
    if tf % 128 != 0 or d_ff % tf != 0:
        tf = d_ff

    grid = (n_pad // tm, d_ff // tf)
    kernel = functools.partial(_ffn_kernel, d_ff=d_ff, eps=1e-5)

    out = pl.pallas_call(
        kernel,
        out_shape=jax.ShapeDtypeStruct((n_pad, d_model), x.dtype),
        grid_spec=pltpu.PrefetchScalarGridSpec(
            num_scalar_prefetch=0,
            grid=grid,
            in_specs=[
                pl.BlockSpec((tm, d_model), lambda i, k: (i, 0)),   # x row tile
                pl.BlockSpec((d_model, tf), lambda i, k: (0, k)),   # W1 col block
                pl.BlockSpec((1, tf), lambda i, k: (0, k)),         # b1 block
                pl.BlockSpec((tf, d_model), lambda i, k: (k, 0)),   # W2 row block
                pl.BlockSpec((1, d_model), lambda i, k: (0, 0)),    # b2
            ],
            out_specs=pl.BlockSpec((tm, d_model), lambda i, k: (i, 0)),
            scratch_shapes=[
                pltpu.VMEM((tm, d_model), jnp.float32),   # y accumulator
                pltpu.VMEM((tm, 1), jnp.float32),         # row sum(h)
                pltpu.VMEM((tm, 1), jnp.float32),         # row sum(h*h)
                pltpu.VMEM((1, d_model), jnp.float32),    # colsum(W2)
            ],
        ),
        compiler_params=pltpu.CompilerParams(
            dimension_semantics=("parallel", "arbitrary"),
            vmem_limit_bytes=vmem_limit_bytes,
        ),
    )(x, w1, b1, w2, b2)
    return out[:n]


def _reference(x, w1, b1, w2, b2, eps=1e-5):
    f32 = jnp.float32
    h = x.astype(f32) @ w1.astype(f32) + b1.reshape(1, -1).astype(f32)
    h = jax.nn.gelu(h, approximate=True)
    mean = jnp.mean(h, axis=-1, keepdims=True)
    var = jnp.mean((h - mean) ** 2, axis=-1, keepdims=True)
    h = (h - mean) * jax.lax.rsqrt(var + eps)
    return h @ w2.astype(f32) + b2.reshape(1, -1).astype(f32)


if __name__ == "__main__":
    d_model, d_ff = 128, 512
    key = jax.random.PRNGKey(0)
    kx, k1, kb1, k2, kb2, kx2 = jax.random.split(key, 6)

    # nn.Linear-style init bounds, deterministic.
    lim1 = 1.0 / (d_model ** 0.5)
    w1 = jax.random.uniform(k1, (d_model, d_ff), jnp.float32, -lim1, lim1)
    b1 = jax.random.uniform(kb1, (1, d_ff), jnp.float32, -lim1, lim1)
    lim2 = 1.0 / (d_ff ** 0.5)
    w2 = jax.random.uniform(k2, (d_ff, d_model), jnp.float32, -lim2, lim2)
    b2 = jax.random.uniform(kb2, (1, d_model), jnp.float32, -lim2, lim2)

    # --- check 1: f32 operands, odd token count (exercises row padding) ---
    batch, seq = 3, 5
    x = jax.random.normal(kx2, (batch, seq, d_model), dtype=jnp.float32)
    x2d = x.reshape(batch * seq, d_model)
    out = feed_forward(x2d, w1, b1, w2, b2, block_rows=256, block_ff=256)
    out = jax.block_until_ready(out)
    ref = _reference(x2d, w1, b1, w2, b2)
    assert out.shape == (batch * seq, d_model)
    assert jnp.allclose(out, ref, atol=2e-3, rtol=2e-3), "f32 mismatch vs reference"

    # --- check 2: bf16 MXU operands (perf path), f32 math / accumulation ---
    batch, seq = 2, 8
    x = jax.random.normal(kx, (batch, seq, d_model), dtype=jnp.float32)
    x2d_bf = x.reshape(batch * seq, d_model).astype(jnp.bfloat16)
    w1b, b1b = w1.astype(jnp.bfloat16), b1.astype(jnp.bfloat16)
    w2b, b2b = w2.astype(jnp.bfloat16), b2.astype(jnp.bfloat16)
    out_bf = feed_forward(x2d_bf, w1b, b1b, w2b, b2b,
                          block_rows=256, block_ff=256)
    out_bf = jax.block_until_ready(out_bf)
    ref_bf = _reference(x2d_bf, w1b, b1b, w2b, b2b)
    assert out_bf.shape == (batch * seq, d_model)
    assert jnp.allclose(out_bf.astype(jnp.float32), ref_bf,
                        atol=5e-2, rtol=5e-2), "bf16 mismatch vs reference"

    print("KERNEL_OK")
</pallas_src>

<mosaic_0001>
module attributes {stable_mosaic.version = 11 : i64} {
  func.func @_ffn_kernel(%arg0: i32, %arg1: i32, %arg2: memref<16x128xf32, #tpu.memory_space<vmem>>, %arg3: memref<128x256xf32, #tpu.memory_space<vmem>>, %arg4: memref<1x256xf32, #tpu.memory_space<vmem>>, %arg5: memref<256x128xf32, #tpu.memory_space<vmem>>, %arg6: memref<1x128xf32, #tpu.memory_space<vmem>>, %arg7: memref<16x128xf32, #tpu.memory_space<vmem>>, %arg8: memref<16x128xf32, #tpu.memory_space<vmem>>, %arg9: memref<16x1xf32, #tpu.memory_space<vmem>>, %arg10: memref<16x1xf32, #tpu.memory_space<vmem>>, %arg11: memref<1x128xf32, #tpu.memory_space<vmem>>) attributes {dimension_semantics = [#tpu.dimension_semantics<parallel>, #tpu.dimension_semantics<arbitrary>], iteration_bounds = array<i64: 1, 2>, scalar_prefetch = 0 : i64, scratch_operands = 4 : i64, tpu.core_type = #tpu.core_type<tc>, window_params = [{transform_indices = @transform_0, window_bounds = array<i64: 16, 128>}, {transform_indices = @transform_1, window_bounds = array<i64: 128, 256>}, {transform_indices = @transform_2, window_bounds = array<i64: 1, 256>}, {transform_indices = @transform_3, window_bounds = array<i64: 256, 128>}, {pipeline_mode = #tpu.pipeline_mode<synchronous>, transform_indices = @transform_4, window_bounds = array<i64: 1, 128>}, {transform_indices = @transform_5, window_bounds = array<i64: 16, 128>}]} {
    %c0_i32 = arith.constant 0 : i32
    %0 = arith.cmpi eq, %arg1, %c0_i32 : i32
    %1 = arith.extui %0 : i1 to i32
    %c0_i32_0 = arith.constant 0 : i32
    %2 = arith.cmpi ne, %1, %c0_i32_0 : i32
    scf.if %2 {
      %cst_33 = arith.constant 0.000000e+00 : f32
      %46 = vector.broadcast %cst_33 : f32 to vector<16x128xf32>
      %c0_34 = arith.constant 0 : index
      %c0_35 = arith.constant 0 : index
      %47 = vector.load %arg8[%c0_34, %c0_35] : memref<16x128xf32, #tpu.memory_space<vmem>>, vector<16x128xf32>
      tpu.vector_store %arg8[%c0_34, %c0_35], %46 {strides = array<i32>} : memref<16x128xf32, #tpu.memory_space<vmem>>, vector<16x128xf32>,
      %cst_36 = arith.constant 0.000000e+00 : f32
      %48 = vector.broadcast %cst_36 : f32 to vector<16x1xf32>
      %c0_37 = arith.constant 0 : index
      %c0_38 = arith.constant 0 : index
      %49 = vector.load %arg9[%c0_37, %c0_38] : memref<16x1xf32, #tpu.memory_space<vmem>>, vector<16x1xf32>
      tpu.vector_store %arg9[%c0_37, %c0_38], %48 {strides = array<i32>} : memref<16x1xf32, #tpu.memory_space<vmem>>, vector<16x1xf32>,
      %cst_39 = arith.constant 0.000000e+00 : f32
      %50 = vector.broadcast %cst_39 : f32 to vector<16x1xf32>
      %c0_40 = arith.constant 0 : index
      %c0_41 = arith.constant 0 : index
      %51 = vector.load %arg10[%c0_40, %c0_41] : memref<16x1xf32, #tpu.memory_space<vmem>>, vector<16x1xf32>
      tpu.vector_store %arg10[%c0_40, %c0_41], %50 {strides = array<i32>} : memref<16x1xf32, #tpu.memory_space<vmem>>, vector<16x1xf32>,
      %cst_42 = arith.constant 0.000000e+00 : f32
      %52 = vector.broadcast %cst_42 : f32 to vector<1x128xf32>
      %c0_43 = arith.constant 0 : index
      %c0_44 = arith.constant 0 : index
      %53 = vector.load %arg11[%c0_43, %c0_44] : memref<1x128xf32, #tpu.memory_space<vmem>>, vector<1x128xf32>
      tpu.vector_store %arg11[%c0_43, %c0_44], %52 {strides = array<i32>} : memref<1x128xf32, #tpu.memory_space<vmem>>, vector<1x128xf32>,
    } else {
    }
    %c0 = arith.constant 0 : index
    %c0_1 = arith.constant 0 : index
    %3 = vector.load %arg2[%c0, %c0_1] : memref<16x128xf32, #tpu.memory_space<vmem>>, vector<16x128xf32>
    %c0_2 = arith.constant 0 : index
    %c0_3 = arith.constant 0 : index
    %4 = vector.load %arg3[%c0_2, %c0_3] : memref<128x256xf32, #tpu.memory_space<vmem>>, vector<128x256xf32>
    %cst = arith.constant dense<0.000000e+00> : vector<16x256xf32>
    %5 = tpu.matmul %3, %4, %cst {dimension_numbers = #tpu.dot_dimension_numbers<[1], [0], [0], [1], [0, 0, 1, 1], [], []>} : vector<16x128xf32>, vector<128x256xf32>, vector<16x256xf32> -> vector<16x256xf32>
    %c0_4 = arith.constant 0 : index
    %c0_5 = arith.constant 0 : index
    %6 = vector.load %arg4[%c0_4, %c0_5] : memref<1x256xf32, #tpu.memory_space<vmem>>, vector<1x256xf32>
    %7 = vector.broadcast %6 : vector<1x256xf32> to vector<16x256xf32>
    %8 = arith.addf %5, %7 : vector<16x256xf32>
    %9 = arith.mulf %8, %8 : vector<16x256xf32>
    %10 = arith.mulf %8, %9 : vector<16x256xf32>
    %cst_6 = arith.constant 4.471500e-02 : f32
    %11 = vector.broadcast %cst_6 : f32 to vector<16x256xf32>
    %12 = arith.mulf %11, %10 : vector<16x256xf32>
    %13 = arith.addf %8, %12 : vector<16x256xf32>
    %cst_7 = arith.constant 0.797884583 : f32
    %14 = vector.broadcast %cst_7 : f32 to vector<16x256xf32>
    %15 = arith.mulf %14, %13 : vector<16x256xf32>
    %16 = math.tanh %15 : vector<16x256xf32>
    %cst_8 = arith.constant 1.000000e+00 : f32
    %17 = vector.broadcast %cst_8 : f32 to vector<16x256xf32>
    %18 = arith.addf %17, %16 : vector<16x256xf32>
    %cst_9 = arith.constant 5.000000e-01 : f32
    %19 = vector.broadcast %cst_9 : f32 to vector<16x256xf32>
    %20 = arith.mulf %19, %18 : vector<16x256xf32>
    %21 = arith.mulf %8, %20 : vector<16x256xf32>
    %c0_10 = arith.constant 0 : index
    %c0_11 = arith.constant 0 : index
    %22 = vector.load %arg9[%c0_10, %c0_11] : memref<16x1xf32, #tpu.memory_space<vmem>>, vector<16x1xf32>
    %cst_12 = arith.constant dense<0.000000e+00> : vector<16xf32>
    %23 = vector.multi_reduction <add>, %21, %cst_12 [1] : vector<16x256xf32> to vector<16xf32>
    %24 = vector.shape_cast %23 : vector<16xf32> to vector<16x1xf32>
    %25 = arith.addf %22, %24 : vector<16x1xf32>
    %c0_13 = arith.constant 0 : index
    %c0_14 = arith.constant 0 : index
    %26 = vector.load %arg9[%c0_13, %c0_14] : memref<16x1xf32, #tpu.memory_space<vmem>>, vector<16x1xf32>
    tpu.vector_store %arg9[%c0_13, %c0_14], %25 {strides = array<i32>} : memref<16x1xf32, #tpu.memory_space<vmem>>, vector<16x1xf32>,
    %c0_15 = arith.constant 0 : index
    %c0_16 = arith.constant 0 : index
    %27 = vector.load %arg10[%c0_15, %c0_16] : memref<16x1xf32, #tpu.memory_space<vmem>>, vector<16x1xf32>
    %28 = arith.mulf %21, %21 : vector<16x256xf32>
    %cst_17 = arith.constant dense<0.000000e+00> : vector<16xf32>
    %29 = vector.multi_reduction <add>, %28, %cst_17 [1] : vector<16x256xf32> to vector<16xf32>
    %30 = vector.shape_cast %29 : vector<16xf32> to vector<16x1xf32>
    %31 = arith.addf %27, %30 : vector<16x1xf32>
    %c0_18 = arith.constant 0 : index
    %c0_19 = arith.constant 0 : index
    %32 = vector.load %arg10[%c0_18, %c0_19] : memref<16x1xf32, #tpu.memory_space<vmem>>, vector<16x1xf32>
    tpu.vector_store %arg10[%c0_18, %c0_19], %31 {strides = array<i32>} : memref<16x1xf32, #tpu.memory_space<vmem>>, vector<16x1xf32>,
    %c0_20 = arith.constant 0 : index
    %c0_21 = arith.constant 0 : index
    %33 = vector.load %arg5[%c0_20, %c0_21] : memref<256x128xf32, #tpu.memory_space<vmem>>, vector<256x128xf32>
    %c0_22 = arith.constant 0 : index
    %c0_23 = arith.constant 0 : index
    %34 = vector.load %arg11[%c0_22, %c0_23] : memref<1x128xf32, #tpu.memory_space<vmem>>, vector<1x128xf32>
    %cst_24 = arith.constant dense<0.000000e+00> : vector<128xf32>
    %35 = vector.multi_reduction <add>, %33, %cst_24 [0] : vector<256x128xf32> to vector<128xf32>
    %36 = vector.shape_cast %35 : vector<128xf32> to vector<1x128xf32>
    %37 = arith.addf %34, %36 : vector<1x128xf32>
    %c0_25 = arith.constant 0 : index
    %c0_26 = arith.constant 0 : index
    %38 = vector.load %arg11[%c0_25, %c0_26] : memref<1x128xf32, #tpu.memory_space<vmem>>, vector<1x128xf32>
    tpu.vector_store %arg11[%c0_25, %c0_26], %37 {strides = array<i32>} : memref<1x128xf32, #tpu.memory_space<vmem>>, vector<1x128xf32>,
    %c0_27 = arith.constant 0 : index
    %c0_28 = arith.constant 0 : index
    %39 = vector.load %arg8[%c0_27, %c0_28] : memref<16x128xf32, #tpu.memory_space<vmem>>, vector<16x128xf32>
    %cst_29 = arith.constant dense<0.000000e+00> : vector<16x128xf32>
    %40 = tpu.matmul %21, %33, %cst_29 {dimension_numbers = #tpu.dot_dimension_numbers<[1], [0], [0], [1], [0, 0, 1, 1], [], []>} : vector<16x256xf32>, vector<256x128xf32>, vector<16x128xf32> -> vector<16x128xf32>
    %41 = arith.addf %39, %40 : vector<16x128xf32>
    %c0_30 = arith.constant 0 : index
    %c0_31 = arith.constant 0 : index
    %42 = vector.load %arg8[%c0_30, %c0_31] : memref<16x128xf32, #tpu.memory_space<vmem>>, vector<16x128xf32>
    tpu.vector_store %arg8[%c0_30, %c0_31], %41 {strides = array<i32>} : memref<16x128xf32, #tpu.memory_space<vmem>>, vector<16x128xf32>,
    %c1_i32 = arith.constant 1 : i32
    %43 = arith.cmpi eq, %arg1, %c1_i32 : i32
    %44 = arith.extui %43 : i1 to i32
    %c0_i32_32 = arith.constant 0 : i32
    %45 = arith.cmpi ne, %44, %c0_i32_32 : i32
    scf.if %45 {
      %c0_33 = arith.constant 0 : index
      %c0_34 = arith.constant 0 : index
      %46 = vector.load %arg9[%c0_33, %c0_34] : memref<16x1xf32, #tpu.memory_space<vmem>>, vector<16x1xf32>
      %cst_35 = arith.constant 0.001953125 : f32
      %47 = vector.broadcast %cst_35 : f32 to vector<16x1xf32>
      %48 = arith.mulf %46, %47 : vector<16x1xf32>
      %c0_36 = arith.constant 0 : index
      %c0_37 = arith.constant 0 : index
      %49 = vector.load %arg10[%c0_36, %c0_37] : memref<16x1xf32, #tpu.memory_space<vmem>>, vector<16x1xf32>
      %cst_38 = arith.constant 0.001953125 : f32
      %50 = vector.broadcast %cst_38 : f32 to vector<16x1xf32>
      %51 = arith.mulf %49, %50 : vector<16x1xf32>
      %52 = arith.mulf %48, %48 : vector<16x1xf32>
      %53 = arith.subf %51, %52 : vector<16x1xf32>
      %cst_39 = arith.constant 0.000000e+00 : f32
      %54 = vector.broadcast %cst_39 : f32 to vector<16x1xf32>
      %55 = arith.maximumf %53, %54 : vector<16x1xf32>
      %cst_40 = arith.constant 9.99999974E-6 : f32
      %56 = vector.broadcast %cst_40 : f32 to vector<16x1xf32>
      %57 = arith.addf %55, %56 : vector<16x1xf32>
      %58 = math.rsqrt %57 : vector<16x1xf32>
      %c0_41 = arith.constant 0 : index
      %c0_42 = arith.constant 0 : index
      %59 = vector.load %arg8[%c0_41, %c0_42] : memref<16x128xf32, #tpu.memory_space<vmem>>, vector<16x128xf32>
      %c0_43 = arith.constant 0 : index
      %c0_44 = arith.constant 0 : index
      %60 = vector.load %arg11[%c0_43, %c0_44] : memref<1x128xf32, #tpu.memory_space<vmem>>, vector<1x128xf32>
      %61 = vector.broadcast %48 : vector<16x1xf32> to vector<16x128xf32>
      %62 = vector.broadcast %60 : vector<1x128xf32> to vector<16x128xf32>
      %63 = arith.mulf %61, %62 : vector<16x128xf32>
      %64 = arith.subf %59, %63 : vector<16x128xf32>
      %65 = vector.broadcast %58 : vector<16x1xf32> to vector<16x128xf32>
      %66 = arith.mulf %65, %64 : vector<16x128xf32>
      %c0_45 = arith.constant 0 : index
      %c0_46 = arith.constant 0 : index
      %67 = vector.load %arg6[%c0_45, %c0_46] : memref<1x128xf32, #tpu.memory_space<vmem>>, vector<1x128xf32>
      %68 = vector.broadcast %67 : vector<1x128xf32> to vector<16x128xf32>
      %69 = arith.addf %66, %68 : vector<16x128xf32>
      %c0_47 = arith.constant 0 : index
      %c0_48 = arith.constant 0 : index
      %70 = vector.load %arg7[%c0_47, %c0_48] : memref<16x128xf32, #tpu.memory_space<vmem>>, vector<16x128xf32>
      tpu.vector_store %arg7[%c0_47, %c0_48], %69 {strides = array<i32>} : memref<16x128xf32, #tpu.memory_space<vmem>>, vector<16x128xf32>,
    } else {
    }
    return
  }
  func.func @transform_0(%arg0: i32, %arg1: i32) -> (i32, i32) {
    %c0_i32 = arith.constant 0 : i32
    %c0_i32_0 = arith.constant 0 : i32
    return %arg0, %c0_i32 : i32, i32
  }
  func.func @transform_1(%arg0: i32, %arg1: i32) -> (i32, i32) {
    %c0_i32 = arith.constant 0 : i32
    %c0_i32_0 = arith.constant 0 : i32
    return %c0_i32, %arg1 : i32, i32
  }
  func.func @transform_2(%arg0: i32, %arg1: i32) -> (i32, i32) {
    %c0_i32 = arith.constant 0 : i32
    %c0_i32_0 = arith.constant 0 : i32
    return %c0_i32, %arg1 : i32, i32
  }
  func.func @transform_3(%arg0: i32, %arg1: i32) -> (i32, i32) {
    %c0_i32 = arith.constant 0 : i32
    %c0_i32_0 = arith.constant 0 : i32
    return %arg1, %c0_i32 : i32, i32
  }
  func.func @transform_4(%arg0: i32, %arg1: i32) -> (i32, i32) {
    %c0_i32 = arith.constant 0 : i32
    %c0_i32_0 = arith.constant 0 : i32
    %c0_i32_1 = arith.constant 0 : i32
    return %c0_i32, %c0_i32_0 : i32, i32
  }
  func.func @transform_5(%arg0: i32, %arg1: i32) -> (i32, i32) {
    %c0_i32 = arith.constant 0 : i32
    %c0_i32_0 = arith.constant 0 : i32
    return %arg0, %c0_i32 : i32, i32
  }
}

</mosaic_0001>

<llo_original>
// kernel: feed_forward.1
$region0: #{feed_forward.1}
  #allocation0 [shape = 'u32[]', space=smem, size = 0x4, offset = 0x4, fixed_abs, tag = 'smem constant byte address 0x4 - core index']
  #allocation1 [shape = 'u32[144,128]{1,0:T(1,128)}', space=vmem, size = 0x12000, scoped, tag = 'internal scratch']
  #allocation2 [shape = 'f32[16,128]{1,0:T(8,128)}', space=vmem, size = 0x2000, scoped, tag = 'scratch operand']
  #allocation3 [shape = 'f32[16,1]{1,0:T(8,128)}', space=vmem, size = 0x2000, scoped, tag = 'scratch operand']
  #allocation4 [shape = 'f32[16,1]{1,0:T(8,128)}', space=vmem, size = 0x2000, scoped, tag = 'scratch operand']
  #allocation5 [shape = 'f32[1,128]{1,0:T(1,128)}', space=vmem, size = 0x200, scoped, tag = 'scratch operand']
  %s0 = inlined_call_operand.vmem [shape: f32[16,128], index: 0, kind: input, shape index: {}]
  %s1 = inlined_call_operand.hbm [shape: f32[128,512], index: 1, kind: input, shape index: {}]
  %s2 = inlined_call_operand.vmem [shape: f32[1,512], index: 2, kind: input, shape index: {}]
  %s3 = inlined_call_operand.hbm [shape: f32[512,128], index: 3, kind: input, shape index: {}]
  %s4 = inlined_call_operand.vmem [shape: f32[1,128], index: 4, kind: input, shape index: {}]
  %s5 = inlined_call_operand.hbm [shape: f32[16,128], index: 5, kind: output, shape index: {}]
  %s6 = sld [smem:[#allocation0]]
  $region69: #{feed_forward.1} parent=0
    _
  %s8 = ssub.s32 1, %s6
  %s9 = scalar_select 0, %s8, %s6
  $region1: #{feed_forward.1} parent=0
    #allocation6 [shape = 'u8[262144]{0}', space=vmem, size = 0x40000, scoped, tag = 'input window, operand 1']
    #allocation7 [shape = 's32[2]{0}', space=sflag, size = 0x8, scoped, tag = 'scoped memory for feed_forward.1']
    #allocation8 [shape = 's32[2]{0}', space=sflag, size = 0x8, scoped, tag = 'scoped memory for feed_forward.1']
    #allocation9 [shape = 'u8[262144]{0}', space=vmem, size = 0x40000, scoped, tag = 'input window, operand 3']
    #allocation10 [shape = 's32[2]{0}', space=sflag, size = 0x8, scoped, tag = 'scoped memory for feed_forward.1']
    #allocation11 [shape = 'u8[8192]{0}', space=vmem, size = 0x2000, scoped, tag = 'output window, operand 0, single buffered']
    %10 = vsyncpa [#allocation7], 0
    %s11 = scalar_lea.sflag [#allocation7], 1
    %12 = vsyncpa %s11, 0
    %13 = vsyncpa [#allocation10], 0
    %s14 = scalar_lea.sflag [#allocation10], 1
    %15 = vsyncpa %s14, 0
    %16 = vsyncpa [#allocation8], 0
    loop: start=0, step=1, limit=4
    $region2: #{feed_forward.1} parent=1 // loop_pre_header
      _
    $region3: #{feed_forward.1} parent=1 // loop_header
      %s18 = sphi 0, %s22
      %p19 = scmp.ge.s32.totalorder %s18, 4
      %s25 = sphi 0, %s37
      %s26 = sphi 0, %s33
      %s27 = sphi 0, %s25
      %s28 = sphi 0, %s26
      %s29 = sphi 0, %s27
      %s30 = sphi 0, %s28
      %s40 = sphi 0, %s42
      %s43 = sphi 0, %s40
      %s44 = sphi 0, %s43
      %s60 = sphi 0, %s44
      %s66 = sphi 0, %s68
      %s69 = sphi 0, %s66
      %s70 = sphi 0, %s69
      %s86 = sphi 0, %s70
      %s92 = sphi 0, %s94
      %s95 = sphi 0, %s92
      %s96 = sphi 0, %s95
      %s112 = sphi 0, %s96
      %s118 = sphi 0, %s120
      %s121 = sphi 0, %s118
      %s122 = sphi 0, %s121
      %s138 = sphi 0, %s122
      %s142 = sphi 0, %s142
      %s144 = sphi 0, %s142
      %s145 = sphi 0, %s144
      %s159 = sphi 0, %s145
      %s165 = sphi 0, %s167
      %s168 = sphi 0, %s165
      %s169 = sphi 0, %s168
      %s185 = sphi 0, %s169
    $region4: #{feed_forward.1} parent=1 // loop_header_branch
      %21 = sbr.rel (%p19) target = $region8
    $region5: #{feed_forward.1} parent=1 // loop_body
      %s23 = ssub.s32 %s18, 1
      %s24 = ssub.s32 %s18, 2
      %s31 = sadd.s32 1, %s26
      %p32 = scmp.ge.s32.totalorder %s31, 2
      %s33 = scalar_select %p32, 0, %s31
      %s34 = sadd.s32 1, %s25
      %s35 = scalar_select %p32, %s34, %s25
      %p36 = scmp.ge.s32.totalorder %s35, 1
      %s37 = scalar_select %p36, 0, %s35
      %s38 = ssub.s32 %s25, %s37
      %p39 = scmp.eq.s32.totalorder %s38, 0
      %s41 = sadd.s32 %s40, 1
      %s42 = scalar_select %p39, %s40, %s41
      %p45 = pneg %p39
      %p46 = scmp.eq.s32.totalorder %s18, 1
      %p47 = por %p45, %p46
      %p48 = scmp.ne.s32.totalorder %s40, %s43
      %p49 = scmp.eq.s32.totalorder %s18, 0
      %p50 = por %p48, %p49
      %p51 = scmp.ne.s32.totalorder %s40, %s43
      %p52 = scmp.eq.s32.totalorder %s23, 1
      %p53 = por %p51, %p52
      %p54 = scmp.ne.s32.totalorder %s43, %s44
      %p55 = scmp.eq.s32.totalorder %s23, 0
      %p56 = por %p54, %p55
      %p57 = scmp.ne.s32.totalorder %s43, %s44
      %p58 = scmp.eq.s32.totalorder %s24, 1
      %p59 = por %p57, %p58
      %p61 = scmp.ne.s32.totalorder %s44, %s60
      %p62 = scmp.eq.s32.totalorder %s24, 0
      %p63 = por %p61, %p62
      %s64 = ssub.s32 %s26, %s33
      %p65 = scmp.eq.s32.totalorder %s64, 0
      %s67 = sadd.s32 %s66, 1
      %s68 = scalar_select %p65, %s66, %s67
      %p71 = pneg %p65
      %p72 = scmp.eq.s32.totalorder %s18, 1
      %p73 = por %p71, %p72
      %p74 = scmp.ne.s32.totalorder %s66, %s69
      %p75 = scmp.eq.s32.totalorder %s18, 0
      %p76 = por %p74, %p75
      %p77 = scmp.ne.s32.totalorder %s66, %s69
      %p78 = scmp.eq.s32.totalorder %s23, 1
      %p79 = por %p77, %p78
      %p80 = scmp.ne.s32.totalorder %s69, %s70
      %p81 = scmp.eq.s32.totalorder %s23, 0
      %p82 = por %p80, %p81
      %p83 = scmp.ne.s32.totalorder %s69, %s70
      %p84 = scmp.eq.s32.totalorder %s24, 1
      %p85 = por %p83, %p84
      %p87 = scmp.ne.s32.totalorder %s70, %s86
      %p88 = scmp.eq.s32.totalorder %s24, 0
      %p89 = por %p87, %p88
      %s90 = ssub.s32 %s26, %s33
      %p91 = scmp.eq.s32.totalorder %s90, 0
      %s93 = sadd.s32 %s92, 1
      %s94 = scalar_select %p91, %s92, %s93
      %p97 = pneg %p91
      %p98 = scmp.eq.s32.totalorder %s18, 1
      %p99 = por %p97, %p98
      %p100 = scmp.ne.s32.totalorder %s92, %s95
      %p101 = scmp.eq.s32.totalorder %s18, 0
      %p102 = por %p100, %p101
      %p103 = scmp.ne.s32.totalorder %s92, %s95
      %p104 = scmp.eq.s32.totalorder %s23, 1
      %p105 = por %p103, %p104
      %p106 = scmp.ne.s32.totalorder %s95, %s96
      %p107 = scmp.eq.s32.totalorder %s23, 0
      %p108 = por %p106, %p107
      %p109 = scmp.ne.s32.totalorder %s95, %s96
      %p110 = scmp.eq.s32.totalorder %s24, 1
      %p111 = por %p109, %p110
      %p113 = scmp.ne.s32.totalorder %s96, %s112
      %p114 = scmp.eq.s32.totalorder %s24, 0
      %p115 = por %p113, %p114
      %s116 = ssub.s32 %s26, %s33
      %p117 = scmp.eq.s32.totalorder %s116, 0
      %s119 = sadd.s32 %s118, 1
      %s120 = scalar_select %p117, %s118, %s119
      %p123 = pneg %p117
      %p124 = scmp.eq.s32.totalorder %s18, 1
      %p125 = por %p123, %p124
      %p126 = scmp.ne.s32.totalorder %s118, %s121
      %p127 = scmp.eq.s32.totalorder %s18, 0
      %p128 = por %p126, %p127
      %p129 = scmp.ne.s32.totalorder %s118, %s121
      %p130 = scmp.eq.s32.totalorder %s23, 1
      %p131 = por %p129, %p130
      %p132 = scmp.ne.s32.totalorder %s121, %s122
      %p133 = scmp.eq.s32.totalorder %s23, 0
      %p134 = por %p132, %p133
      %p135 = scmp.ne.s32.totalorder %s121, %s122
      %p136 = scmp.eq.s32.totalorder %s24, 1
      %p137 = por %p135, %p136
      %p139 = scmp.ne.s32.totalorder %s122, %s138
      %p140 = scmp.eq.s32.totalorder %s24, 0
      %p141 = por %p139, %p140
      %s143 = sadd.s32 %s142, 1
      %p146 = scmp.eq.s32.totalorder %s18, 1
      %p147 = scmp.ne.s32.totalorder %s142, %s144
      %p148 = scmp.eq.s32.totalorder %s18, 0
      %p149 = por %p147, %p148
      %p150 = scmp.ne.s32.totalorder %s142, %s144
      %p151 = scmp.eq.s32.totalorder %s23, 1
      %p152 = por %p150, %p151
      %p153 = scmp.ne.s32.totalorder %s144, %s145
      %p154 = scmp.eq.s32.totalorder %s23, 0
      %p155 = por %p153, %p154
      %p156 = scmp.ne.s32.totalorder %s144, %s145
      %p157 = scmp.eq.s32.totalorder %s24, 1
      %p158 = por %p156, %p157
      %p160 = scmp.ne.s32.totalorder %s145, %s159
      %p161 = scmp.eq.s32.totalorder %s24, 0
      %p162 = por %p160, %p161
      %s163 = ssub.s32 %s25, %s37
      %p164 = scmp.eq.s32.totalorder %s163, 0
      %s166 = sadd.s32 %s165, 1
      %s167 = scalar_select %p164, %s165, %s166
      %p170 = pneg %p164
      %p171 = scmp.eq.s32.totalorder %s18, 1
      %p172 = por %p170, %p171
      %p173 = scmp.ne.s32.totalorder %s165, %s168
      %p174 = scmp.eq.s32.totalorder %s18, 0
      %p175 = por %p173, %p174
      %p176 = scmp.ne.s32.totalorder %s165, %s168
      %p177 = scmp.eq.s32.totalorder %s23, 1
      %p178 = por %p176, %p177
      %p179 = scmp.ne.s32.totalorder %s168, %s169
      %p180 = scmp.eq.s32.totalorder %s23, 0
      %p181 = por %p179, %p180
      %p182 = scmp.ne.s32.totalorder %s168, %s169
      %p183 = scmp.eq.s32.totalorder %s24, 1
      %p184 = por %p182, %p183
      %p186 = scmp.ne.s32.totalorder %s169, %s185
      %p187 = scmp.eq.s32.totalorder %s24, 0
      %p188 = por %p186, %p187
      %p189 = scmp.le.s32.totalorder 1, %s18
      %p190 = scmp.lt.s32.totalorder %s18, 3
      %p191 = pnand %p189, %p190
      %p192 = pneg %p191
      // Predicated region
      $region9: #{feed_forward.1} parent=5 // pred_check
        _
      $region10: #{feed_forward.1} parent=5 // pred_check_branch
        %194 = sbr.rel (%p191) target = $region12
      $region11: #{feed_forward.1} parent=5 // pred_region
        %s195 = ssub.s32 %s18, 1
        // Predicated region
        $region13: #{feed_forward.1} parent=11 // pred_check
          %p196 = pneg %p56
        $region14: #{feed_forward.1} parent=11 // pred_check_branch
          %198 = sbr.rel (%p196) target = $region16
        $region15: #{feed_forward.1} parent=11 // pred_region
          %s199 = smul.u32 2, %s27
          %p200 = scmp.lt.s32.totalorder %s199, 1
          %s201 = scalar_select %p200, %s199, 1
          %s202 = smul.addr %s201, 8
          %s203 = scalar_lea.vmem %s0, %s202
          %s204 = smul.u32 2, %s27
        $region16: #{feed_forward.1} parent=11 // pred_fallthru
          _
        // Predicated region
        $region17: #{feed_forward.1} parent=11 // pred_check
          %p205 = pneg %p155
        $region18: #{feed_forward.1} parent=11 // pred_check_branch
          %207 = sbr.rel (%p205) target = $region20
        $region19: #{feed_forward.1} parent=11 // pred_region
          _
        $region20: #{feed_forward.1} parent=11 // pred_fallthru
          _
      $region12: #{feed_forward.1} parent=5 // pred_fallthru
        _
      %p208 = scmp.lt.s32.totalorder %s18, 2
      // Predicated region
      $region21: #{feed_forward.1} parent=5 // pred_check
        %p209 = pneg %p208
      $region22: #{feed_forward.1} parent=5 // pred_check_branch
        %211 = sbr.rel (%p209) target = $region24
      $region23: #{feed_forward.1} parent=5 // pred_region
        // Predicated region
        $region25: #{feed_forward.1} parent=23 // pred_check
          %p212 = pneg %p76
        $region26: #{feed_forward.1} parent=23 // pred_check_branch
          %214 = sbr.rel (%p212) target = $region28
        $region27: #{feed_forward.1} parent=23 // pred_region
          %s215 = sand.u32 %s66, 1
          %s216 = scalar_lea.sflag [#allocation7], %s215
          %s217 = sand.u32 %s66, 1
          %s218 = smul.addr %s217, 256
          %s219 = scalar_lea.vmem [#allocation6], %s218
          %s220 = smul.u32 2, %s26
          %s222 = ssub.s32 4096, 4096
          %223 = vsyncadd %s216, %s222
          %s224 = smul.addr %s220, 128
          %s225 = scalar_lea.hbm %s1, %s224
          %s226 = sshll.u32 %s219, 4
          %s227 = int_to_ptr.vmem [resolvable:$true] %s226
          %232 = dma.hbm_to_vmem [thread:$0]  %s225, 4096, %s227, %s216, 512, 256, 16
        $region28: #{feed_forward.1} parent=23 // pred_fallthru
          _
        // Predicated region
        $region29: #{feed_forward.1} parent=23 // pred_check
          %p233 = pneg %p102
        $region30: #{feed_forward.1} parent=23 // pred_check_branch
          %235 = sbr.rel (%p233) target = $region32
        $region31: #{feed_forward.1} parent=23 // pred_region
          %s236 = smul.u32 2, %s26
          %p237 = scmp.lt.s32.totalorder %s236, 3
          %s238 = scalar_select %p237, %s236, 3
          %s239 = scalar_lea.vmem %s2, %s238
          %s240 = smul.u32 2, %s26
        $region32: #{feed_forward.1} parent=23 // pred_fallthru
          _
        // Predicated region
        $region33: #{feed_forward.1} parent=23 // pred_check
          %p241 = pneg %p128
        $region34: #{feed_forward.1} parent=23 // pred_check_branch
          %243 = sbr.rel (%p241) target = $region36
        $region35: #{feed_forward.1} parent=23 // pred_region
          %s244 = sand.u32 %s118, 1
          %s245 = scalar_lea.sflag [#allocation10], %s244
          %s246 = sand.u32 %s118, 1
          %s247 = smul.addr %s246, 256
          %s248 = scalar_lea.vmem [#allocation9], %s247
          %s249 = smul.u32 32, %s26
          %s251 = ssub.s32 4096, 4096
          %252 = vsyncadd %s245, %s251
          %s253 = smul.addr %s249, 128
          %s254 = scalar_lea.hbm %s3, %s253
          %s255 = sshll.u32 %s248, 4
          %s256 = int_to_ptr.vmem [resolvable:$true] %s255
          %261 = dma.hbm_to_vmem [thread:$0]  %s254, 4096, %s256, %s245, 128, 128, 8
        $region36: #{feed_forward.1} parent=23 // pred_fallthru
          _
      $region24: #{feed_forward.1} parent=5 // pred_fallthru
        _
      %p262 = scmp.le.s32.totalorder 1, %s18
      %p263 = scmp.lt.s32.totalorder %s18, 3
      %p264 = pnand %p262, %p263
      %p265 = pneg %p264
      // Predicated region
      $region37: #{feed_forward.1} parent=5 // pred_check
        _
      $region38: #{feed_forward.1} parent=5 // pred_check_branch
        %267 = sbr.rel (%p264) target = $region40
      $region39: #{feed_forward.1} parent=5 // pred_region
        %s268 = ssub.s32 %s18, 1
        %s269 = sand.u32 %s69, 1
        %s270 = scalar_lea.sflag [#allocation7], %s269
        %s271 = sand.u32 %s69, 1
        %s272 = smul.addr %s271, 256
        %s273 = scalar_lea.vmem [#allocation6], %s272
        // Predicated region
        $region41: #{feed_forward.1} parent=39 // pred_check
          %p274 = pneg %p82
        $region42: #{feed_forward.1} parent=39 // pred_check_branch
          %276 = sbr.rel (%p274) target = $region44
        $region43: #{feed_forward.1} parent=39 // pred_region
          %277 = dma.done %s270, 4096
        $region44: #{feed_forward.1} parent=39 // pred_fallthru
          _
        %s278 = sand.u32 %s121, 1
        %s279 = scalar_lea.sflag [#allocation10], %s278
        %s280 = sand.u32 %s121, 1
        %s281 = smul.addr %s280, 256
        %s282 = scalar_lea.vmem [#allocation9], %s281
        // Predicated region
        $region45: #{feed_forward.1} parent=39 // pred_check
          %p283 = pneg %p134
        $region46: #{feed_forward.1} parent=39 // pred_check_branch
          %285 = sbr.rel (%p283) target = $region48
        $region47: #{feed_forward.1} parent=39 // pred_region
          %286 = dma.done %s279, 4096
        $region48: #{feed_forward.1} parent=39 // pred_fallthru
          _
        %s287 = smul.u32 2, %s27
        %p288 = scmp.lt.s32.totalorder %s287, 1
        %s289 = scalar_select %p288, %s287, 1
        %s290 = smul.addr %s289, 8
        %s291 = scalar_lea.vmem %s0, %s290
        %p292 = pneg %p56
        %p293 = pneg %p53
        %s294 = sand.u32 %s69, 1
        %s295 = scalar_lea.sflag [#allocation7], %s294
        %s296 = sand.u32 %s69, 1
        %s297 = smul.addr %s296, 256
        %s298 = scalar_lea.vmem [#allocation6], %s297
        %p299 = pneg %p82
        %p300 = pneg %p79
        %s301 = smul.u32 2, %s28
        %p302 = scmp.lt.s32.totalorder %s301, 3
        %s303 = scalar_select %p302, %s301, 3
        %s304 = scalar_lea.vmem %s2, %s303
        %p305 = pneg %p108
        %p306 = pneg %p105
        %s307 = sand.u32 %s121, 1
        %s308 = scalar_lea.sflag [#allocation10], %s307
        %s309 = sand.u32 %s121, 1
        %s310 = smul.addr %s309, 256
        %s311 = scalar_lea.vmem [#allocation9], %s310
        %p312 = pneg %p134
        %p313 = pneg %p131
        %p314 = pneg %p155
        %p315 = pneg %p152
        %p316 = pneg %p181
        %p317 = pneg %p178
        %s318 = smul.u32 2, %s27
        %p319 = scmp.lt.s32.totalorder %s318, 1
        %s320 = scalar_select %p319, %s318, 1
        %s321 = smul.addr %s320, 8
        %s322 = scalar_lea.vmem %s0, %s321
        %s323 = smul.u32 2, %s27
        %s324 = smul.u32 2, %s28
        %s325 = smul.u32 2, %s28
        %p326 = scmp.lt.s32.totalorder %s325, 3
        %s327 = scalar_select %p326, %s325, 3
        %s328 = scalar_lea.vmem %s2, %s327
        %s329 = smul.u32 2, %s28
        %s330 = smul.u32 32, %s28
        %s331 = smul.u32 2, %s27
        %p332 = scmp.eq.s32.totalorder %s28, 0
        // Predicated region
        $region49: #{feed_forward.1} parent=39 // pred_check
          %p333 = pneg %p332
        $region50: #{feed_forward.1} parent=39 // pred_check_branch
          %335 = sbr.rel (%p333) target = $region52
        $region51: #{feed_forward.1} parent=39 // pred_region
          %336 = vst [vmem:[#allocation2] sm:$0xff] 0.0
          %337 = vst [vmem:[#allocation2 + $0x8] sm:$0xff] 0.0
          %vm338 = vcmask 7168
          %339 = vst.msk [vmem:[#allocation3] sm:$0xff] %vm338, 0.0
          %340 = vst.msk [vmem:[#allocation3 + $0x8] sm:$0xff] %vm338, 0.0
          %341 = vst.msk [vmem:[#allocation4] sm:$0xff] %vm338, 0.0
          %342 = vst.msk [vmem:[#allocation4 + $0x8] sm:$0xff] %vm338, 0.0
          %343 = vst [vmem:[#allocation5] sm:$0x1] 0.0
        $region52: #{feed_forward.1} parent=39 // pred_fallthru
          _
        %v344 = vld [vmem:[%s322] sm:$0xff]
        %v345 = vld [vmem:[%s322 + $0x8] sm:$0xff]
        %v346 = vld [vmem:[%s273] sm:$0xff]
        %v347 = vld [vmem:[%s273 + $0x8] sm:$0xff]
        %v348 = vld [vmem:[%s273 + $0x10] sm:$0xff]
        %v349 = vld [vmem:[%s273 + $0x18] sm:$0xff]
        %v350 = vld [vmem:[%s273 + $0x20] sm:$0xff]
        %v351 = vld [vmem:[%s273 + $0x28] sm:$0xff]
        %v352 = vld [vmem:[%s273 + $0x30] sm:$0xff]
        %v353 = vld [vmem:[%s273 + $0x38] sm:$0xff]
        %v354 = vld [vmem:[%s273 + $0x40] sm:$0xff]
        %v355 = vld [vmem:[%s273 + $0x48] sm:$0xff]
        %v356 = vld [vmem:[%s273 + $0x50] sm:$0xff]
        %v357 = vld [vmem:[%s273 + $0x58] sm:$0xff]
        %v358 = vld [vmem:[%s273 + $0x60] sm:$0xff]
        %v359 = vld [vmem:[%s273 + $0x68] sm:$0xff]
        %v360 = vld [vmem:[%s273 + $0x70] sm:$0xff]
        %v361 = vld [vmem:[%s273 + $0x78] sm:$0xff]
        %v362 = vld [vmem:[%s273 + $0x80] sm:$0xff]
        %v363 = vld [vmem:[%s273 + $0x88] sm:$0xff]
        %v364 = vld [vmem:[%s273 + $0x90] sm:$0xff]
        %v365 = vld [vmem:[%s273 + $0x98] sm:$0xff]
        %v366 = vld [vmem:[%s273 + $0xa0] sm:$0xff]
        %v367 = vld [vmem:[%s273 + $0xa8] sm:$0xff]
        %v368 = vld [vmem:[%s273 + $0xb0] sm:$0xff]
        %v369 = vld [vmem:[%s273 + $0xb8] sm:$0xff]
        %v370 = vld [vmem:[%s273 + $0xc0] sm:$0xff]
        %v371 = vld [vmem:[%s273 + $0xc8] sm:$0xff]
        %v372 = vld [vmem:[%s273 + $0xd0] sm:$0xff]
        %v373 = vld [vmem:[%s273 + $0xd8] sm:$0xff]
        %v374 = vld [vmem:[%s273 + $0xe0] sm:$0xff]
        %v375 = vld [vmem:[%s273 + $0xe8] sm:$0xff]
        %v376 = vld [vmem:[%s273 + $0xf0] sm:$0xff]
        %v377 = vld [vmem:[%s273 + $0xf8] sm:$0xff]
        %v378 = vld [vmem:[%s328] sm:$0x3]
        %v380 = vlaneseq
        %v381 = vshrl.u32 %v380, 7
        %v382 = vsub.s32 0, %v381
        %v383 = vrot.slane %v378, %v382
        %v384 = vlaneseq
        %v385 = vshrl.u32 %v384, 7
        %v386 = vsub.s32 1, %v385
        %v387 = vrot.slane %v378, %v386
        %390 = vmatprep.subr.mxu0 %v347
        %391 = vmatpush1.msra.mxu0 %v346
        %392 = vmatprep.subr.mxu0 %v349
        %393 = vmatpush1.msra.mxu0 %v348
        %394 = vmatprep.subr.mxu0 %v351
        %395 = vmatpush1.msra.mxu0 %v350
        %396 = vmatprep.subr.mxu0 %v353
        %397 = vmatpush1.msra.mxu0 %v352
        %398 = vmatprep.subr.mxu0 %v355
        %399 = vmatpush1.msra.mxu0 %v354
        %400 = vmatprep.subr.mxu0 %v357
        %401 = vmatpush1.msra.mxu0 %v356
        %402 = vmatprep.subr.mxu0 %v359
        %403 = vmatpush1.msra.mxu0 %v358
        %404 = vmatprep.subr.mxu0 %v361
        %405 = vmatpush1.msra.mxu0 %v360
        %406 = vmatprep.subr.mxu0 %v363
        %407 = vmatpush1.msra.mxu0 %v362
        %408 = vmatprep.subr.mxu0 %v365
        %409 = vmatpush1.msra.mxu0 %v364
        %410 = vmatprep.subr.mxu0 %v367
        %411 = vmatpush1.msra.mxu0 %v366
        %412 = vmatprep.subr.mxu0 %v369
        %413 = vmatpush1.msra.mxu0 %v368
        %414 = vmatprep.subr.mxu0 %v371
        %415 = vmatpush1.msra.mxu0 %v370
        %416 = vmatprep.subr.mxu0 %v373
        %417 = vmatpush1.msra.mxu0 %v372
        %418 = vmatprep.subr.mxu0 %v375
        %419 = vmatpush1.msra.mxu0 %v374
        %420 = vmatprep.subr.mxu0 %v377
        %421 = vmatpush1.msra.mxu0 %v376
        %422 = vmatprep.subr.mxu0 0.0
        %423 = vmatpush1.msra.mxu0 0.0
        %424 = vmatprep.subr.mxu0 0.0
        %425 = vmatpush1.msra.mxu0 0.0
        %426 = vmatprep.subr.mxu0 0.0
        %427 = vmatpush1.msra.mxu0 0.0
        %428 = vmatprep.subr.mxu0 0.0
        %429 = vmatpush1.msra.mxu0 0.0
        %430 = vmatprep.subr.mxu0 0.0
        %431 = vmatpush1.msra.mxu0 0.0
        %432 = vmatprep.subr.mxu0 0.0
        %433 = vmatpush1.msra.mxu0 0.0
        %434 = vmatprep.subr.mxu0 0.0
        %435 = vmatpush1.msra.mxu0 0.0
        %436 = vmatprep.subr.mxu0 0.0
        %437 = vmatpush1.msra.mxu0 0.0
        %438 = vmatprep.subr.mxu0 0.0
        %439 = vmatpush1.msra.mxu0 0.0
        %440 = vmatprep.subr.mxu0 0.0
        %441 = vmatpush1.msra.mxu0 0.0
        %442 = vmatprep.subr.mxu0 0.0
        %443 = vmatpush1.msra.mxu0 0.0
        %444 = vmatprep.subr.mxu0 0.0
        %445 = vmatpush1.msra.mxu0 0.0
        %446 = vmatprep.subr.mxu0 0.0
        %447 = vmatpush1.msra.mxu0 0.0
        %448 = vmatprep.subr.mxu0 0.0
        %449 = vmatpush1.msra.mxu0 0.0
        %450 = vmatprep.subr.mxu0 0.0
        %451 = vmatpush1.msra.mxu0 0.0
        %452 = vmatprep.subr.mxu0 0.0
        %453 = vmatpush1.msra.mxu0 0.0
        %454 = vmatprep.mubr.f32.mxu0 0.0
        %455 = vmatmul.mubr.f32.gmra.mrb[0].mxu0 %v344
        %v456 = vpop.f32.mrb[0].mxu0
        %v457 = vadd.f32 %v383, %v456
        %v458 = vpop.f32.mrb[0].mxu0
        %v459 = vadd.f32 %v387, %v458
        %460 = vmatprep.mubr.f32.mxu0 0.0
        %461 = vmatmul.mubr.f32.gmra.mrb[0].mxu0 %v345
        %v462 = vpop.f32.mrb[0].mxu0
        %v463 = vadd.f32 %v383, %v462
        %v464 = vpop.f32.mrb[0].mxu0
        %v465 = vadd.f32 %v387, %v464
        %466 = vdwg.mxu0
        %v467 = vmul.f32 %v457, %v457
        %v468 = vmul.f32 %v459, %v459
        %v469 = vmul.f32 %v463, %v463
        %v470 = vmul.f32 %v465, %v465
        %v471 = vmul.f32 %v457, %v467
        %v472 = vmul.f32 %v459, %v468
        %v473 = vmul.f32 %v463, %v469
        %v474 = vmul.f32 %v465, %v470
        %v475 = vmul.f32 %v471, 0.044715
        %v476 = vmul.f32 %v472, 0.044715
        %v477 = vmul.f32 %v473, 0.044715
        %v478 = vmul.f32 %v474, 0.044715
        %v479 = vadd.f32 %v457, %v475
        %v480 = vadd.f32 %v459, %v476
        %v481 = vadd.f32 %v463, %v477
        %v482 = vadd.f32 %v465, %v478
        %v483 = vmul.f32 %v479, 0.7978846
        %v484 = vmul.f32 %v480, 0.7978846
        %v485 = vmul.f32 %v481, 0.7978846
        %v486 = vmul.f32 %v482, 0.7978846
        %v487 = vtanh.pop %v483
        %v488 = vtanh.pop %v484
        %v489 = vtanh.pop %v485
        %v490 = vtanh.pop %v486
        %v491 = vadd.f32 %v487, 1.0
        %v492 = vadd.f32 %v488, 1.0
        %v493 = vadd.f32 %v489, 1.0
        %v494 = vadd.f32 %v490, 1.0
        %v495 = vmul.f32 %v491, 0.5
        %v496 = vmul.f32 %v492, 0.5
        %v497 = vmul.f32 %v493, 0.5
        %v498 = vmul.f32 %v494, 0.5
        %v499 = vmul.f32 %v457, %v495
        %v500 = vmul.f32 %v459, %v496
        %v501 = vmul.f32 %v463, %v497
        %v502 = vmul.f32 %v465, %v498
        %v503 = vld [vmem:[#allocation3] sm:$0xff]
        %v504 = vld [vmem:[#allocation3 + $0x8] sm:$0xff]
        %v505 = vadd.f32 %v499, %v500
        %506 = vadd.xlane.f32.xlu0 %v505
        %v507 = vpop.xlane.xlu0 %506
        %v508 = vadd.f32 %v501, %v502
        %509 = vadd.xlane.f32.xlu0 %v508
        %v510 = vpop.xlane.xlu0 %509
        %v511 = vadd.f32 %v503, %v507
        %v512 = vadd.f32 %v504, %v510
        %vm513 = vcmask 7168
        %514 = vst.msk [vmem:[#allocation3] sm:$0xff] %vm513, %v511
        %515 = vst.msk [vmem:[#allocation3 + $0x8] sm:$0xff] %vm513, %v512
        %v516 = vld [vmem:[#allocation4] sm:$0xff]
        %v517 = vld [vmem:[#allocation4 + $0x8] sm:$0xff]
        %v518 = vmul.f32 %v499, %v499
        %v519 = vmul.f32 %v500, %v500
        %v520 = vmul.f32 %v501, %v501
        %v521 = vmul.f32 %v502, %v502
        %v522 = vadd.f32 %v518, %v519
        %523 = vadd.xlane.f32.xlu0 %v522
        %v524 = vpop.xlane.xlu0 %523
        %v525 = vadd.f32 %v520, %v521
        %526 = vadd.xlane.f32.xlu0 %v525
        %v527 = vpop.xlane.xlu0 %526
        %v528 = vadd.f32 %v516, %v524
        %v529 = vadd.f32 %v517, %v527
        %530 = vst.msk [vmem:[#allocation4] sm:$0xff] %vm513, %v528
        %531 = vst.msk [vmem:[#allocation4 + $0x8] sm:$0xff] %vm513, %v529
        %v532 = vld [vmem:[%s282] sm:$0xff]
        %v533 = vld [vmem:[%s282 + $0x8] sm:$0xff]
        %v534 = vld [vmem:[%s282 + $0x10] sm:$0xff]
        %v535 = vld [vmem:[%s282 + $0x18] sm:$0xff]
        %v536 = vld [vmem:[%s282 + $0x20] sm:$0xff]
        %v537 = vld [vmem:[%s282 + $0x28] sm:$0xff]
        %v538 = vld [vmem:[%s282 + $0x30] sm:$0xff]
        %v539 = vld [vmem:[%s282 + $0x38] sm:$0xff]
        %v540 = vld [vmem:[%s282 + $0x40] sm:$0xff]
        %v541 = vld [vmem:[%s282 + $0x48] sm:$0xff]
        %v542 = vld [vmem:[%s282 + $0x50] sm:$0xff]
        %v543 = vld [vmem:[%s282 + $0x58] sm:$0xff]
        %v544 = vld [vmem:[%s282 + $0x60] sm:$0xff]
        %v545 = vld [vmem:[%s282 + $0x68] sm:$0xff]
        %v546 = vld [vmem:[%s282 + $0x70] sm:$0xff]
        %v547 = vld [vmem:[%s282 + $0x78] sm:$0xff]
        %v548 = vld [vmem:[%s282 + $0x80] sm:$0xff]
        %v549 = vld [vmem:[%s282 + $0x88] sm:$0xff]
        %v550 = vld [vmem:[%s282 + $0x90] sm:$0xff]
        %v551 = vld [vmem:[%s282 + $0x98] sm:$0xff]
        %v552 = vld [vmem:[%s282 + $0xa0] sm:$0xff]
        %v553 = vld [vmem:[%s282 + $0xa8] sm:$0xff]
        %v554 = vld [vmem:[%s282 + $0xb0] sm:$0xff]
        %v555 = vld [vmem:[%s282 + $0xb8] sm:$0xff]
        %v556 = vld [vmem:[%s282 + $0xc0] sm:$0xff]
        %v557 = vld [vmem:[%s282 + $0xc8] sm:$0xff]
        %v558 = vld [vmem:[%s282 + $0xd0] sm:$0xff]
        %v559 = vld [vmem:[%s282 + $0xd8] sm:$0xff]
        %v560 = vld [vmem:[%s282 + $0xe0] sm:$0xff]
        %v561 = vld [vmem:[%s282 + $0xe8] sm:$0xff]
        %v562 = vld [vmem:[%s282 + $0xf0] sm:$0xff]
        %v563 = vld [vmem:[%s282 + $0xf8] sm:$0xff]
        %v564 = vld [vmem:[#allocation5] sm:$0x1]
        %v565 = vadd.f32 %v532, %v533
        %v566 = vadd.f32 %v565, %v534
        %v567 = vadd.f32 %v566, %v535
        %v568 = vadd.f32 %v567, %v536
        %v569 = vadd.f32 %v568, %v537
        %v570 = vadd.f32 %v569, %v538
        %v571 = vadd.f32 %v570, %v539
        %v572 = vadd.f32 %v571, %v540
        %v573 = vadd.f32 %v572, %v541
        %v574 = vadd.f32 %v573, %v542
        %v575 = vadd.f32 %v574, %v543
        %v576 = vadd.f32 %v575, %v544
        %v577 = vadd.f32 %v576, %v545
        %v578 = vadd.f32 %v577, %v546
        %v579 = vadd.f32 %v578, %v547
        %v580 = vadd.f32 %v579, %v548
        %v581 = vadd.f32 %v580, %v549
        %v582 = vadd.f32 %v581, %v550
        %v583 = vadd.f32 %v582, %v551
        %v584 = vadd.f32 %v583, %v552
        %v585 = vadd.f32 %v584, %v553
        %v586 = vadd.f32 %v585, %v554
        %v587 = vadd.f32 %v586, %v555
        %v588 = vadd.f32 %v587, %v556
        %v589 = vadd.f32 %v588, %v557
        %v590 = vadd.f32 %v589, %v558
        %v591 = vadd.f32 %v590, %v559
        %v592 = vadd.f32 %v591, %v560
        %v593 = vadd.f32 %v592, %v561
        %v594 = vadd.f32 %v593, %v562
        %v595 = vadd.f32 %v594, %v563
        %v596 = vrot.slane %v595, 4
        %v597 = vadd.f32 %v595, %v596
        %v598 = vrot.slane %v597, 2
        %v599 = vadd.f32 %v597, %v598
        %v600 = vrot.slane %v599, 1
        %v601 = vadd.f32 %v599, %v600
        %v602 = vadd.f32 %v564, %v601
        %603 = vst [vmem:[#allocation5] sm:$0x1] %v602
        %v604 = vld [vmem:[#allocation2] sm:$0xff]
        %v605 = vld [vmem:[#allocation2 + $0x8] sm:$0xff]
        %606 = vmatprep.subr.mxu0 0.0
        %607 = vmatpush1.msra.mxu0 %v532
        %608 = vmatprep.subr.mxu0 0.0
        %609 = vmatpush1.msra.mxu0 %v533
        %610 = vmatprep.subr.mxu0 0.0
        %611 = vmatpush1.msra.mxu0 %v534
        %612 = vmatprep.subr.mxu0 0.0
        %613 = vmatpush1.msra.mxu0 %v535
        %614 = vmatprep.subr.mxu0 0.0
        %615 = vmatpush1.msra.mxu0 %v536
        %616 = vmatprep.subr.mxu0 0.0
        %617 = vmatpush1.msra.mxu0 %v537
        %618 = vmatprep.subr.mxu0 0.0
        %619 = vmatpush1.msra.mxu0 %v538
        %620 = vmatprep.subr.mxu0 0.0
        %621 = vmatpush1.msra.mxu0 %v539
        %622 = vmatprep.subr.mxu0 0.0
        %623 = vmatpush1.msra.mxu0 %v540
        %624 = vmatprep.subr.mxu0 0.0
        %625 = vmatpush1.msra.mxu0 %v541
        %626 = vmatprep.subr.mxu0 0.0
        %627 = vmatpush1.msra.mxu0 %v542
        %628 = vmatprep.subr.mxu0 0.0
        %629 = vmatpush1.msra.mxu0 %v543
        %630 = vmatprep.subr.mxu0 0.0
        %631 = vmatpush1.msra.mxu0 %v544
        %632 = vmatprep.subr.mxu0 0.0
        %633 = vmatpush1.msra.mxu0 %v545
        %634 = vmatprep.subr.mxu0 0.0
        %635 = vmatpush1.msra.mxu0 %v546
        %636 = vmatprep.subr.mxu0 0.0
        %637 = vmatpush1.msra.mxu0 %v547
        %638 = vmatprep.subr.mxu0 0.0
        %639 = vmatpush1.msra.mxu0 %v548
        %640 = vmatprep.subr.mxu0 0.0
        %641 = vmatpush1.msra.mxu0 %v549
        %642 = vmatprep.subr.mxu0 0.0
        %643 = vmatpush1.msra.mxu0 %v550
        %644 = vmatprep.subr.mxu0 0.0
        %645 = vmatpush1.msra.mxu0 %v551
        %646 = vmatprep.subr.mxu0 0.0
        %647 = vmatpush1.msra.mxu0 %v552
        %648 = vmatprep.subr.mxu0 0.0
        %649 = vmatpush1.msra.mxu0 %v553
        %650 = vmatprep.subr.mxu0 0.0
        %651 = vmatpush1.msra.mxu0 %v554
        %652 = vmatprep.subr.mxu0 0.0
        %653 = vmatpush1.msra.mxu0 %v555
        %654 = vmatprep.subr.mxu0 0.0
        %655 = vmatpush1.msra.mxu0 %v556
        %656 = vmatprep.subr.mxu0 0.0
        %657 = vmatpush1.msra.mxu0 %v557
        %658 = vmatprep.subr.mxu0 0.0
        %659 = vmatpush1.msra.mxu0 %v558
        %660 = vmatprep.subr.mxu0 0.0
        %661 = vmatpush1.msra.mxu0 %v559
        %662 = vmatprep.subr.mxu0 0.0
        %663 = vmatpush1.msra.mxu0 %v560
        %664 = vmatprep.subr.mxu0 0.0
        %665 = vmatpush1.msra.mxu0 %v561
        %666 = vmatprep.subr.mxu0 0.0
        %667 = vmatpush1.msra.mxu0 %v562
        %668 = vmatprep.subr.mxu0 0.0
        %669 = vmatpush1.msra.mxu0 %v563
        %670 = vmatprep.mubr.f32.mxu0 %v500
        %671 = vmatmul.mubr.f32.gmra.mrb[0].mxu0 %v499
        %v672 = vpop.f32.mrb[0].mxu0
        %v673 = vadd.f32 0.0, %v672
        %v674 = vpop.f32.mrb[0].mxu0
        %675 = vmatprep.mubr.f32.mxu0 %v502
        %676 = vmatmul.mubr.f32.gmra.mrb[0].mxu0 %v501
        %v677 = vpop.f32.mrb[0].mxu0
        %v678 = vadd.f32 0.0, %v677
        %v679 = vpop.f32.mrb[0].mxu0
        %680 = vdwg.mxu0
        %v681 = vadd.f32 %v604, %v673
        %v682 = vadd.f32 %v605, %v678
        %683 = vst [vmem:[#allocation2] sm:$0xff] %v681
        %684 = vst [vmem:[#allocation2 + $0x8] sm:$0xff] %v682
        %p685 = scmp.eq.s32.totalorder %s28, 1
        // Predicated region
        $region53: #{feed_forward.1} parent=39 // pred_check
          %p686 = pneg %p685
        $region54: #{feed_forward.1} parent=39 // pred_check_branch
          %688 = sbr.rel (%p686) target = $region56
        $region55: #{feed_forward.1} parent=39 // pred_region
          %v689 = vld [vmem:[#allocation3] sm:$0xff]
          %v690 = vld [vmem:[#allocation3 + $0x8] sm:$0xff]
          %v691 = vmul.f32 %v689, 0.001953125
          %v692 = vmul.f32 %v690, 0.001953125
          %v693 = vld [vmem:[#allocation4] sm:$0xff]
          %v694 = vld [vmem:[#allocation4 + $0x8] sm:$0xff]
          %v695 = vmul.f32 %v693, 0.001953125
          %v696 = vmul.f32 %v694, 0.001953125
          %v697 = vmul.f32 %v691, %v691
          %v698 = vmul.f32 %v692, %v692
          %v699 = vsub.f32 %v695, %v697
          %v700 = vsub.f32 %v696, %v698
          %v701 = vmax.f32 %v699, 0.0
          %v702 = vmax.f32 %v700, 0.0
          %v703 = vadd.f32 %v701, 1e-05
          %v704 = vadd.f32 %v702, 1e-05
          %v705 = vrsqrt.pop %v703
          %v706 = vrsqrt.pop %v704
          %v707 = vld [vmem:[#allocation2] sm:$0xff]
          %v708 = vld [vmem:[#allocation2 + $0x8] sm:$0xff]
          %v709 = vld [vmem:[#allocation5] sm:$0x1]
          %711 = vset.pattern.permute.xlu0 0
          %712 = vperm.xlu0 %711, %v691
          %v713 = vpop.permute.xlu0 %712
          %716 = vset.pattern.permute.xlu0 0
          %717 = vperm.xlu0 %716, %v692
          %v718 = vpop.permute.xlu0 %717
          %v721 = vlaneseq
          %v722 = vshrl.u32 %v721, 7
          %v723 = vsub.s32 0, %v722
          %v724 = vrot.slane %v709, %v723
          %v726 = vmul.f32 %v713, %v724
          %v727 = vmul.f32 %v718, %v724
          %v728 = vsub.f32 %v707, %v726
          %v729 = vsub.f32 %v708, %v727
          %731 = vset.pattern.permute.xlu0 0
          %732 = vperm.xlu0 %731, %v705
          %v733 = vpop.permute.xlu0 %732
          %736 = vset.pattern.permute.xlu0 0
          %737 = vperm.xlu0 %736, %v706
          %v738 = vpop.permute.xlu0 %737
          %v740 = vmul.f32 %v733, %v728
          %v741 = vmul.f32 %v738, %v729
          %v742 = vld [vmem:[%s4] sm:$0x1]
          %v744 = vlaneseq
          %v745 = vshrl.u32 %v744, 7
          %v746 = vsub.s32 0, %v745
          %v747 = vrot.slane %v742, %v746
          %v749 = vadd.f32 %v740, %v747
          %v750 = vadd.f32 %v741, %v747
          %751 = vst [vmem:[#allocation11] sm:$0xff] %v749
          %752 = vst [vmem:[#allocation11 + $0x8] sm:$0xff] %v750
        $region56: #{feed_forward.1} parent=39 // pred_fallthru
          _
        // Predicated region
        $region57: #{feed_forward.1} parent=39 // pred_check
          %p753 = pneg %p178
        $region58: #{feed_forward.1} parent=39 // pred_check_branch
          %755 = sbr.rel (%p753) target = $region60
        $region59: #{feed_forward.1} parent=39 // pred_region
          %s756 = smul.u32 2, %s27
          %s758 = ssub.s32 256, 256
          %759 = vsyncadd [#allocation8], %s758
          %s760 = smul.addr %s756, 128
          %s761 = scalar_lea.hbm %s5, %s760
          %s762 = sshll.u32 [#allocation11], 4
          %s763 = int_to_ptr.vmem [resolvable:$true] %s762
          %768 = dma.vmem_to_hbm [thread:$0]  %s763, 256, %s761, [#allocation8], 128, 128, 8
        $region60: #{feed_forward.1} parent=39 // pred_fallthru
          _
        // Predicated region
        $region61: #{feed_forward.1} parent=39 // pred_check
          %p769 = pneg %p178
        $region62: #{feed_forward.1} parent=39 // pred_check_branch
          %771 = sbr.rel (%p769) target = $region64
        $region63: #{feed_forward.1} parent=39 // pred_region
          %772 = dma.done [#allocation8], 256
        $region64: #{feed_forward.1} parent=39 // pred_fallthru
          _
      $region40: #{feed_forward.1} parent=5 // pred_fallthru
        _
      %p773 = scmp.le.s32.totalorder 2, %s18
      // Predicated region
      $region65: #{feed_forward.1} parent=5 // pred_check
        %p774 = pneg %p773
      $region66: #{feed_forward.1} parent=5 // pred_check_branch
        %776 = sbr.rel (%p774) target = $region68
      $region67: #{feed_forward.1} parent=5 // pred_region
        %s777 = ssub.s32 %s18, 2
      $region68: #{feed_forward.1} parent=5 // pred_fallthru
        _
    $region6: #{feed_forward.1} parent=1 // loop_footer
      %s22 = sadd.s32 1, %s18
    $region7: #{feed_forward.1} parent=1 // loop_footer_branch
      %17 = sbr.rel target = $region3
    $region8: #{feed_forward.1} parent=1 // loop_exit
      _
    %778 = vsyncpa [#allocation7], 1
    %s779 = scalar_lea.sflag [#allocation7], 1
    %780 = vsyncpa %s779, 1
    %781 = vsyncpa [#allocation10], 1
    %s782 = scalar_lea.sflag [#allocation10], 1
    %783 = vsyncpa %s782, 1
    %784 = vsyncpa [#allocation8], 1
    %s785 = scalar_lea.sflag [#allocation8], 1
    %786 = vsyncpa %s785, 1

</llo_original>
